<compile_context>
chip_gen: v5e
topology: v5e:2x2
jax: 0.10.0
libtpu: 0.0.40
codegen_flags: <defaults>
</compile_context>

<pallas_src>
import functools

import jax
import jax.numpy as jnp
from jax import lax
from jax.experimental import pallas as pl
from jax.experimental.pallas import tpu as pltpu


# ---------------------------------------------------------------------------
# Kernel
# ---------------------------------------------------------------------------
def _poly1_ce_kernel(logits_ref, labels_ref, *rest, epsilon, label_smoothing,
                     has_weight):
    if has_weight:
        weight_ref, out_ref = rest
    else:
        (out_ref,) = rest
        weight_ref = None

    x = logits_ref[...].astype(jnp.float32)               # (TN, C)
    lab = labels_ref[...]                                  # (TN, 1) int32
    tn, c = x.shape

    # Numerically stable shifted logits + partition function.
    m = jnp.max(x, axis=-1, keepdims=True)                 # (TN, 1)  XLU
    z = x - m                                              # (TN, C)  VPU
    e = jnp.exp(z)                                         # (TN, C)  EUP
    s = jnp.sum(e, axis=-1, keepdims=True)                 # (TN, 1)  XLU
    logs = jnp.log(s)                                      # (TN, 1)  EUP

    # log-prob / prob of the true class via a single masked lane-reduce.
    col = lax.broadcasted_iota(jnp.int32, (tn, c), 1)      # (TN, C)
    is_true = col == lab                                   # (TN, C) bool
    z_true = jnp.sum(jnp.where(is_true, z, 0.0), axis=-1, keepdims=True)
    logp_true = z_true - logs                              # (TN, 1)
    pt = jnp.exp(logp_true)                                # softmax prob of y_i

    if has_weight:
        w = weight_ref[...].astype(jnp.float32)            # (1, C)
        # w[y_i] via the same one-hot mask (no gather needed).
        w_true = jnp.sum(jnp.where(is_true, w, 0.0), axis=-1, keepdims=True)
        nll = -w_true * logp_true                          # (TN, 1)
        # smooth_i = -sum_c w_c * logp_{i,c}
        #          = log(s_i) * sum_c w_c - sum_c w_c * z_{i,c}
        wz_sum = jnp.sum(z * w, axis=-1, keepdims=True)    # (TN, 1)
        w_sum = jnp.sum(w)                                 # scalar
        smooth = w_sum * logs - wz_sum                     # (TN, 1)
    else:
        # weight=None: nll = -logp[true]; smooth = C*log(s) - sum_c z
        nll = -logp_true
        z_sum = jnp.sum(z, axis=-1, keepdims=True)
        smooth = c * logs - z_sum

    # PyTorch F.cross_entropy(..., label_smoothing=ls, reduction='none'):
    #   CE_i = (1-ls) * nll_i + (ls / C) * smooth_i
    ce = (1.0 - label_smoothing) * nll + (label_smoothing / c) * smooth
    poly1 = ce + epsilon * (1.0 - pt)                       # (TN, 1)
    out_ref[...] = poly1.astype(out_ref.dtype)


# ---------------------------------------------------------------------------
# Tile sizing (generation-aware)
# ---------------------------------------------------------------------------
def _vmem_capacity_bytes():
    try:
        return int(pltpu.get_tpu_info().vmem_capacity_bytes)
    except Exception:
        return 64 * 1024 * 1024  # conservative (v7x-sized) fallback


def _pick_tile_n(n, c, in_itemsize, vmem_cap):
    # Budget ~1/3 of physical VMEM for: double-buffered logits tile plus a
    # generous allowance (~8 full-width f32 temporaries) for in-kernel values.
    budget = min(vmem_cap, 128 * 1024 * 1024) // 3
    per_row = 2 * c * in_itemsize + 8 * c * 4 + 64
    tile_n = budget // max(per_row, 1)
    tile_n = int(max(8, min(4096, (tile_n // 8) * 8)))
    # Keep at least 2 grid steps when there is enough work (v7x: 2 TCs).
    if n > 8:
        half = -(-n // 2)
        half = ((half + 7) // 8) * 8
        tile_n = min(tile_n, half)
    else:
        tile_n = 8
    return tile_n


# ---------------------------------------------------------------------------
# Wrapper
# ---------------------------------------------------------------------------
def poly1_cross_entropy_loss(logits, labels, *, num_classes, epsilon=1.0,
                             reduction='none', weight=None,
                             label_smoothing=0.1, tile_n=None):
    """Pallas implementation of Poly1CrossEntropyLoss.forward.

    logits: [N, num_classes] float (f32 or bf16)
    labels: [N] int
    """
    n, c = logits.shape
    assert c == num_classes
    in_itemsize = jnp.dtype(logits.dtype).itemsize
    vmem_cap = _vmem_capacity_bytes()

    if tile_n is None:
        tile_n = _pick_tile_n(n, c, in_itemsize, vmem_cap)
    tile_n = max(8, (int(tile_n) // 8) * 8)

    # Pad N up to a multiple of tile_n (zero rows / label 0); sliced off below.
    n_pad = pl.cdiv(n, tile_n) * tile_n
    if n_pad != n:
        logits = jnp.pad(logits, ((0, n_pad - n), (0, 0)))
        labels = jnp.pad(labels, ((0, n_pad - n),))

    labels2d = labels.astype(jnp.int32).reshape(n_pad, 1)

    has_weight = weight is not None
    operands = [logits, labels2d]
    in_specs = [
        pl.BlockSpec((tile_n, c), lambda i: (i, 0)),   # logits tile
        pl.BlockSpec((tile_n, 1), lambda i: (i, 0)),   # labels tile
    ]
    if has_weight:
        weight_arr = jnp.asarray(weight, dtype=jnp.float32).reshape(1, c)
        operands.append(weight_arr)
        in_specs.append(pl.BlockSpec((1, c), lambda i: (0, 0)))

    kernel = functools.partial(
        _poly1_ce_kernel,
        epsilon=float(epsilon),
        label_smoothing=float(label_smoothing),
        has_weight=has_weight,
    )

    grid = (n_pad // tile_n,)
    vmem_limit = int(min(vmem_cap * 3 // 4, 96 * 1024 * 1024))

    out = pl.pallas_call(
        kernel,
        out_shape=jax.ShapeDtypeStruct((n_pad, 1), jnp.float32),
        grid_spec=pltpu.PrefetchScalarGridSpec(
            num_scalar_prefetch=0,
            grid=grid,
            in_specs=in_specs,
            out_specs=pl.BlockSpec((tile_n, 1), lambda i: (i, 0)),
        ),
        compiler_params=pltpu.CompilerParams(
            dimension_semantics=("parallel",),
            vmem_limit_bytes=vmem_limit,
        ),
    )(*operands)

    poly1 = out.reshape(n_pad)[:n]   # [N], f32, matches reduction='none'

    # The module applies a plain .mean()/.sum() to the final per-sample poly1
    # loss (CE itself uses reduction='none'), so plain jnp reductions match
    # PyTorch exactly, weighted or not.
    if reduction == 'mean':
        poly1 = jnp.mean(poly1)
    elif reduction == 'sum':
        poly1 = jnp.sum(poly1)
    return poly1


# ---------------------------------------------------------------------------
# Pure-JAX reference (mirrors PyTorch semantics)
# ---------------------------------------------------------------------------
def _reference(logits, labels, num_classes, epsilon=1.0, label_smoothing=0.1,
               weight=None, reduction='none'):
    x = logits.astype(jnp.float32)
    logp = jax.nn.log_softmax(x, axis=-1)
    p = jax.nn.softmax(x, axis=-1)
    onehot = jax.nn.one_hot(labels, num_classes, dtype=jnp.float32)
    pt = jnp.sum(onehot * p, axis=-1)
    if weight is None:
        w = jnp.ones((num_classes,), jnp.float32)
    else:
        w = jnp.asarray(weight, jnp.float32)
    wlogp = logp * w[None, :]
    nll = -jnp.sum(onehot * wlogp, axis=-1)
    smooth = -jnp.sum(wlogp, axis=-1)
    ce = (1.0 - label_smoothing) * nll + (label_smoothing / num_classes) * smooth
    poly1 = ce + epsilon * (1.0 - pt)
    if reduction == 'mean':
        poly1 = jnp.mean(poly1)
    elif reduction == 'sum':
        poly1 = jnp.sum(poly1)
    return poly1


if __name__ == "__main__":
    key = jax.random.PRNGKey(0)
    k_logits, k_labels, k_w = jax.random.split(key, 3)

    N, C = 24, 32   # N not a multiple of the tile -> exercises padded tail
    logits = jax.random.normal(k_logits, (N, C), dtype=jnp.float32)
    labels = jax.random.randint(k_labels, (N,), 0, C, dtype=jnp.int32)

    # 1) weight=None, reduction='none' (module defaults)
    loss = poly1_cross_entropy_loss(logits, labels, num_classes=C,
                                    epsilon=1.0, reduction='none')
    loss = jax.block_until_ready(loss)
    ref = _reference(logits, labels, C, epsilon=1.0)
    assert loss.shape == (N,)
    assert loss.dtype == jnp.float32
    assert jnp.allclose(loss, ref, atol=1e-4, rtol=1e-4)

    # 2) per-class weight + reduction='mean'
    w = jax.random.uniform(k_w, (C,), dtype=jnp.float32) + 0.5
    loss_w = poly1_cross_entropy_loss(logits, labels, num_classes=C,
                                      epsilon=1.0, reduction='mean', weight=w)
    loss_w = jax.block_until_ready(loss_w)
    ref_w = _reference(logits, labels, C, epsilon=1.0, weight=w,
                       reduction='mean')
    assert jnp.allclose(loss_w, ref_w, atol=1e-4, rtol=1e-4)

    # 3) per-class weight + reduction='sum'
    loss_ws = poly1_cross_entropy_loss(logits, labels, num_classes=C,
                                       epsilon=1.0, reduction='sum', weight=w)
    loss_ws = jax.block_until_ready(loss_ws)
    ref_ws = _reference(logits, labels, C, epsilon=1.0, weight=w,
                        reduction='sum')
    assert jnp.allclose(loss_ws, ref_ws, atol=1e-3, rtol=1e-4)

    # 4) bf16 logits at the boundary (kernel upcasts; loss stays f32)
    logits_bf16 = logits.astype(jnp.bfloat16)
    loss_bf = poly1_cross_entropy_loss(logits_bf16, labels, num_classes=C,
                                       epsilon=1.0, reduction='none')
    loss_bf = jax.block_until_ready(loss_bf)
    ref_bf = _reference(logits_bf16, labels, C, epsilon=1.0)
    assert loss_bf.dtype == jnp.float32
    assert jnp.allclose(loss_bf, ref_bf, atol=1e-4, rtol=1e-4)

    print("KERNEL_OK")
</pallas_src>

<mosaic_0001>
module attributes {stable_mosaic.version = 11 : i64} {
  func.func @_poly1_ce_kernel(%arg0: i32, %arg1: memref<16x32xf32, #tpu.memory_space<vmem>>, %arg2: memref<16x1xi32, #tpu.memory_space<vmem>>, %arg3: memref<16x1xf32, #tpu.memory_space<vmem>>) attributes {dimension_semantics = [#tpu.dimension_semantics<parallel>], iteration_bounds = array<i64: 2>, scalar_prefetch = 0 : i64, scratch_operands = 0 : i64, tpu.core_type = #tpu.core_type<tc>, window_params = [{transform_indices = @transform_0, window_bounds = array<i64: 16, 32>}, {transform_indices = @transform_1, window_bounds = array<i64: 16, 1>}, {transform_indices = @transform_2, window_bounds = array<i64: 16, 1>}]} {
    %c0 = arith.constant 0 : index
    %c0_0 = arith.constant 0 : index
    %0 = vector.load %arg1[%c0, %c0_0] : memref<16x32xf32, #tpu.memory_space<vmem>>, vector<16x32xf32>
    %c0_1 = arith.constant 0 : index
    %c0_2 = arith.constant 0 : index
    %1 = vector.load %arg2[%c0_1, %c0_2] : memref<16x1xi32, #tpu.memory_space<vmem>>, vector<16x1xi32>
    %cst = arith.constant dense<0xFF800000> : vector<16xf32>
    %2 = vector.multi_reduction <maximumf>, %0, %cst [1] : vector<16x32xf32> to vector<16xf32>
    %3 = vector.shape_cast %2 : vector<16xf32> to vector<16x1xf32>
    %4 = vector.broadcast %3 : vector<16x1xf32> to vector<16x32xf32>
    %5 = arith.subf %0, %4 : vector<16x32xf32>
    %6 = math.exp %5 : vector<16x32xf32>
    %cst_3 = arith.constant dense<0.000000e+00> : vector<16xf32>
    %7 = vector.multi_reduction <add>, %6, %cst_3 [1] : vector<16x32xf32> to vector<16xf32>
    %8 = vector.shape_cast %7 : vector<16xf32> to vector<16x1xf32>
    %9 = math.log %8 : vector<16x1xf32>
    %10 = tpu.iota {dimensions = array<i32: 1>} : vector<16x32xi32>
    %11 = vector.broadcast %1 : vector<16x1xi32> to vector<16x32xi32>
    %12 = arith.cmpi eq, %10, %11 : vector<16x32xi32>
    %cst_4 = arith.constant 0.000000e+00 : f32
    %13 = vector.broadcast %cst_4 : f32 to vector<16x32xf32>
    %14 = arith.select %12, %5, %13 : vector<16x32xi1>, vector<16x32xf32>
    %cst_5 = arith.constant dense<0.000000e+00> : vector<16xf32>
    %15 = vector.multi_reduction <add>, %14, %cst_5 [1] : vector<16x32xf32> to vector<16xf32>
    %16 = vector.shape_cast %15 : vector<16xf32> to vector<16x1xf32>
    %17 = arith.subf %16, %9 : vector<16x1xf32>
    %18 = math.exp %17 : vector<16x1xf32>
    %cst_6 = arith.constant 0.000000e+00 : f32
    %19 = vector.broadcast %cst_6 : f32 to vector<16x1xf32>
    %20 = arith.subf %19, %17 : vector<16x1xf32>
    %cst_7 = arith.constant dense<0.000000e+00> : vector<16xf32>
    %21 = vector.multi_reduction <add>, %5, %cst_7 [1] : vector<16x32xf32> to vector<16xf32>
    %22 = vector.shape_cast %21 : vector<16xf32> to vector<16x1xf32>
    %cst_8 = arith.constant 3.200000e+01 : f32
    %23 = vector.broadcast %cst_8 : f32 to vector<16x1xf32>
    %24 = arith.mulf %23, %9 : vector<16x1xf32>
    %25 = arith.subf %24, %22 : vector<16x1xf32>
    %cst_9 = arith.constant 0.899999976 : f32
    %26 = vector.broadcast %cst_9 : f32 to vector<16x1xf32>
    %27 = arith.mulf %26, %20 : vector<16x1xf32>
    %cst_10 = arith.constant 3.125000e-03 : f32
    %28 = vector.broadcast %cst_10 : f32 to vector<16x1xf32>
    %29 = arith.mulf %28, %25 : vector<16x1xf32>
    %30 = arith.addf %27, %29 : vector<16x1xf32>
    %cst_11 = arith.constant 1.000000e+00 : f32
    %31 = vector.broadcast %cst_11 : f32 to vector<16x1xf32>
    %32 = arith.subf %31, %18 : vector<16x1xf32>
    %cst_12 = arith.constant 1.000000e+00 : f32
    %33 = vector.broadcast %cst_12 : f32 to vector<16x1xf32>
    %34 = arith.mulf %33, %32 : vector<16x1xf32>
    %35 = arith.addf %30, %34 : vector<16x1xf32>
    %c0_13 = arith.constant 0 : index
    %c0_14 = arith.constant 0 : index
    %36 = vector.load %arg3[%c0_13, %c0_14] : memref<16x1xf32, #tpu.memory_space<vmem>>, vector<16x1xf32>
    tpu.vector_store %arg3[%c0_13, %c0_14], %35 {strides = array<i32>} : memref<16x1xf32, #tpu.memory_space<vmem>>, vector<16x1xf32>,
    return
  }
  func.func @transform_0(%arg0: i32) -> (i32, i32) {
    %c0_i32 = arith.constant 0 : i32
    %c0_i32_0 = arith.constant 0 : i32
    return %arg0, %c0_i32 : i32, i32
  }
  func.func @transform_1(%arg0: i32) -> (i32, i32) {
    %c0_i32 = arith.constant 0 : i32
    %c0_i32_0 = arith.constant 0 : i32
    return %arg0, %c0_i32 : i32, i32
  }
  func.func @transform_2(%arg0: i32) -> (i32, i32) {
    %c0_i32 = arith.constant 0 : i32
    %c0_i32_0 = arith.constant 0 : i32
    return %arg0, %c0_i32 : i32, i32
  }
}

</mosaic_0001>

<llo_original>
// kernel: tpu_custom_call.1
$region0: #{tpu_custom_call.1}
  #allocation0 [shape = 'u32[]', space=smem, size = 0x4, offset = 0x4, fixed_abs, tag = 'smem constant byte address 0x4 - core index']
  #allocation1 [shape = 'u32[72,128]{1,0:T(1,128)}', space=vmem, size = 0x9000, scoped, tag = 'internal scratch']
  %s0 = inlined_call_operand.vmem [shape: f32[32,32], index: 0, kind: input, shape index: {}]
  %s1 = inlined_call_operand.vmem [shape: s32[32,1], index: 1, kind: input, shape index: {}]
  %s2 = inlined_call_operand.vmem [shape: f32[32,1], index: 2, kind: output, shape index: {}]
  %s3 = sld [smem:[#allocation0]]
  $region41: #{tpu_custom_call.1} parent=0
    _
  %s5 = ssub.s32 1, %s3
  %s6 = scalar_select 0, %s5, %s3
  loop: start=0, step=1, limit=4
  $region2: #{tpu_custom_call.1} parent=0 // loop_pre_header
    _
  $region3: #{tpu_custom_call.1} parent=0 // loop_header
    %s8 = sphi 0, %s12
    %p9 = scmp.ge.s32.totalorder %s8, 4
    %s18 = sphi 0, %s20
    %s21 = sphi 0, %s18
    %s22 = sphi 0, %s21
    %s38 = sphi 0, %s22
    %s44 = sphi 0, %s46
    %s47 = sphi 0, %s44
    %s48 = sphi 0, %s47
    %s64 = sphi 0, %s48
    %s70 = sphi 0, %s72
    %s73 = sphi 0, %s70
    %s74 = sphi 0, %s73
    %s90 = sphi 0, %s74
  $region4: #{tpu_custom_call.1} parent=0 // loop_header_branch
    %11 = sbr.rel (%p9) target = $region8
  $region5: #{tpu_custom_call.1} parent=0 // loop_body
    %s13 = ssub.s32 %s8, 1
    %s14 = ssub.s32 %s8, 2
    %s15 = sadd.s32 %s8, 1
    %s16 = ssub.s32 %s8, %s15
    %p17 = scmp.eq.s32.totalorder %s16, 0
    %s19 = sadd.s32 %s18, 1
    %s20 = scalar_select %p17, %s18, %s19
    %p23 = pneg %p17
    %p24 = scmp.eq.s32.totalorder %s8, 1
    %p25 = por %p23, %p24
    %p26 = scmp.ne.s32.totalorder %s18, %s21
    %p27 = scmp.eq.s32.totalorder %s8, 0
    %p28 = por %p26, %p27
    %p29 = scmp.ne.s32.totalorder %s18, %s21
    %p30 = scmp.eq.s32.totalorder %s13, 1
    %p31 = por %p29, %p30
    %p32 = scmp.ne.s32.totalorder %s21, %s22
    %p33 = scmp.eq.s32.totalorder %s13, 0
    %p34 = por %p32, %p33
    %p35 = scmp.ne.s32.totalorder %s21, %s22
    %p36 = scmp.eq.s32.totalorder %s14, 1
    %p37 = por %p35, %p36
    %p39 = scmp.ne.s32.totalorder %s22, %s38
    %p40 = scmp.eq.s32.totalorder %s14, 0
    %p41 = por %p39, %p40
    %s42 = ssub.s32 %s8, %s15
    %p43 = scmp.eq.s32.totalorder %s42, 0
    %s45 = sadd.s32 %s44, 1
    %s46 = scalar_select %p43, %s44, %s45
    %p49 = pneg %p43
    %p50 = scmp.eq.s32.totalorder %s8, 1
    %p51 = por %p49, %p50
    %p52 = scmp.ne.s32.totalorder %s44, %s47
    %p53 = scmp.eq.s32.totalorder %s8, 0
    %p54 = por %p52, %p53
    %p55 = scmp.ne.s32.totalorder %s44, %s47
    %p56 = scmp.eq.s32.totalorder %s13, 1
    %p57 = por %p55, %p56
    %p58 = scmp.ne.s32.totalorder %s47, %s48
    %p59 = scmp.eq.s32.totalorder %s13, 0
    %p60 = por %p58, %p59
    %p61 = scmp.ne.s32.totalorder %s47, %s48
    %p62 = scmp.eq.s32.totalorder %s14, 1
    %p63 = por %p61, %p62
    %p65 = scmp.ne.s32.totalorder %s48, %s64
    %p66 = scmp.eq.s32.totalorder %s14, 0
    %p67 = por %p65, %p66
    %s68 = ssub.s32 %s8, %s15
    %p69 = scmp.eq.s32.totalorder %s68, 0
    %s71 = sadd.s32 %s70, 1
    %s72 = scalar_select %p69, %s70, %s71
    %p75 = pneg %p69
    %p76 = scmp.eq.s32.totalorder %s8, 1
    %p77 = por %p75, %p76
    %p78 = scmp.ne.s32.totalorder %s70, %s73
    %p79 = scmp.eq.s32.totalorder %s8, 0
    %p80 = por %p78, %p79
    %p81 = scmp.ne.s32.totalorder %s70, %s73
    %p82 = scmp.eq.s32.totalorder %s13, 1
    %p83 = por %p81, %p82
    %p84 = scmp.ne.s32.totalorder %s73, %s74
    %p85 = scmp.eq.s32.totalorder %s13, 0
    %p86 = por %p84, %p85
    %p87 = scmp.ne.s32.totalorder %s73, %s74
    %p88 = scmp.eq.s32.totalorder %s14, 1
    %p89 = por %p87, %p88
    %p91 = scmp.ne.s32.totalorder %s74, %s90
    %p92 = scmp.eq.s32.totalorder %s14, 0
    %p93 = por %p91, %p92
    %p94 = scmp.le.s32.totalorder 1, %s8
    %p95 = scmp.lt.s32.totalorder %s8, 3
    %p96 = pnand %p94, %p95
    %p97 = pneg %p96
    // Predicated region
    $region9: #{tpu_custom_call.1} parent=5 // pred_check
      _
    $region10: #{tpu_custom_call.1} parent=5 // pred_check_branch
      %99 = sbr.rel (%p96) target = $region12
    $region11: #{tpu_custom_call.1} parent=5 // pred_region
      %s100 = ssub.s32 %s8, 1
    $region12: #{tpu_custom_call.1} parent=5 // pred_fallthru
      _
    %p101 = scmp.lt.s32.totalorder %s8, 2
    // Predicated region
    $region13: #{tpu_custom_call.1} parent=5 // pred_check
      %p102 = pneg %p101
    $region14: #{tpu_custom_call.1} parent=5 // pred_check_branch
      %104 = sbr.rel (%p102) target = $region16
    $region15: #{tpu_custom_call.1} parent=5 // pred_region
      // Predicated region
      $region17: #{tpu_custom_call.1} parent=15 // pred_check
        %p105 = pneg %p28
      $region18: #{tpu_custom_call.1} parent=15 // pred_check_branch
        %107 = sbr.rel (%p105) target = $region20
      $region19: #{tpu_custom_call.1} parent=15 // pred_region
        %s108 = smul.u32 2, %s8
        %p109 = scmp.lt.s32.totalorder %s108, 3
        %s110 = scalar_select %p109, %s108, 3
        %s111 = smul.addr %s110, 8
        %s112 = scalar_lea.vmem %s0, %s111
        %s113 = smul.u32 2, %s8
      $region20: #{tpu_custom_call.1} parent=15 // pred_fallthru
        _
      // Predicated region
      $region21: #{tpu_custom_call.1} parent=15 // pred_check
        %p114 = pneg %p54
      $region22: #{tpu_custom_call.1} parent=15 // pred_check_branch
        %116 = sbr.rel (%p114) target = $region24
      $region23: #{tpu_custom_call.1} parent=15 // pred_region
        %s117 = smul.u32 2, %s8
        %p118 = scmp.lt.s32.totalorder %s117, 3
        %s119 = scalar_select %p118, %s117, 3
        %s120 = smul.addr %s119, 8
        %s121 = scalar_lea.vmem %s1, %s120
        %s122 = smul.u32 2, %s8
      $region24: #{tpu_custom_call.1} parent=15 // pred_fallthru
        _
    $region16: #{tpu_custom_call.1} parent=5 // pred_fallthru
      _
    %p123 = scmp.le.s32.totalorder 1, %s8
    %p124 = scmp.lt.s32.totalorder %s8, 3
    %p125 = pnand %p123, %p124
    %p126 = pneg %p125
    // Predicated region
    $region25: #{tpu_custom_call.1} parent=5 // pred_check
      _
    $region26: #{tpu_custom_call.1} parent=5 // pred_check_branch
      %128 = sbr.rel (%p125) target = $region28
    $region27: #{tpu_custom_call.1} parent=5 // pred_region
      %s129 = ssub.s32 %s8, 1
      %s130 = smul.u32 2, %s13
      %p131 = scmp.lt.s32.totalorder %s130, 3
      %s132 = scalar_select %p131, %s130, 3
      %s133 = smul.addr %s132, 8
      %s134 = scalar_lea.vmem %s0, %s133
      %p135 = pneg %p34
      %p136 = pneg %p31
      %s137 = smul.u32 2, %s13
      %p138 = scmp.lt.s32.totalorder %s137, 3
      %s139 = scalar_select %p138, %s137, 3
      %s140 = smul.addr %s139, 8
      %s141 = scalar_lea.vmem %s1, %s140
      %p142 = pneg %p60
      %p143 = pneg %p57
      %p144 = pneg %p86
      %p145 = pneg %p83
      %s146 = smul.u32 2, %s13
      %p147 = scmp.lt.s32.totalorder %s146, 3
      %s148 = scalar_select %p147, %s146, 3
      %s149 = smul.addr %s148, 8
      %s150 = scalar_lea.vmem %s2, %s149
      %s151 = smul.u32 2, %s13
      %p152 = scmp.lt.s32.totalorder %s151, 3
      %s153 = scalar_select %p152, %s151, 3
      %s154 = smul.addr %s153, 8
      %s155 = scalar_lea.vmem %s0, %s154
      %s156 = smul.u32 2, %s13
      %s157 = smul.u32 2, %s13
      %p158 = scmp.lt.s32.totalorder %s157, 3
      %s159 = scalar_select %p158, %s157, 3
      %s160 = smul.addr %s159, 8
      %s161 = scalar_lea.vmem %s1, %s160
      %s162 = smul.u32 2, %s13
      %s163 = smul.u32 2, %s13
      %p164 = scmp.lt.s32.totalorder %s163, 3
      %s165 = scalar_select %p164, %s163, 3
      %s166 = smul.addr %s165, 8
      %s167 = scalar_lea.vmem %s2, %s166
      %s168 = smul.u32 2, %s13
      %v169 = vld [vmem:[%s155] sm:$0xff]
      %v170 = vld [vmem:[%s155 + $0x8] sm:$0xff]
      %v171 = vld [vmem:[%s161] sm:$0xff]
      %v172 = vld [vmem:[%s161 + $0x8] sm:$0xff]
      %vm173 = vcmask 261120
      %v174 = vsel %vm173, %v169, -inf
      %175 = vmax.xlane.f32.xlu0 %v174
      %v176 = vpop.xlane.xlu0 %175
      %v177 = vsel %vm173, %v170, -inf
      %178 = vmax.xlane.f32.xlu0 %v177
      %v179 = vpop.xlane.xlu0 %178
      %v180 = vsub.f32 %v169, %v176
      %v181 = vsub.f32 %v170, %v179
      %v182 = vmul.f32 %v180, 1.442695
      %v183 = vpow.pop %v182
      %v184 = vmul.f32 %v181, 1.442695
      %v185 = vpow.pop %v184
      %v186 = vsel %vm173, %v183, 0.0
      %187 = vadd.xlane.f32.xlu0 %v186
      %v188 = vpop.xlane.xlu0 %187
      %v189 = vsel %vm173, %v185, 0.0
      %190 = vadd.xlane.f32.xlu0 %v189
      %v191 = vpop.xlane.xlu0 %190
      %v192 = vlog2.pop %v188
      %v193 = vmul.f32 %v192, 0.6931472
      %v194 = vlog2.pop %v191
      %v195 = vmul.f32 %v194, 0.6931472
      %v196 = vlaneseq
      %v197 = vand.u32 %v196, 127
      %198 = vset.pattern.permute.xlu0 0
      %199 = vperm.xlu0 %198, %v171
      %v200 = vpop.permute.xlu0 %199
      %201 = vset.pattern.permute.xlu0 0
      %202 = vperm.xlu0 %201, %v172
      %v203 = vpop.permute.xlu0 %202
      %vm204 = vcmp.eq.s32.totalorder %v197, %v200
      %vm205 = vcmp.eq.s32.totalorder %v197, %v203
      %v206 = vsel %vm204, %v180, 0.0
      %v207 = vsel %vm205, %v181, 0.0
      %v208 = vsel %vm173, %v206, 0.0
      %209 = vadd.xlane.f32.xlu0 %v208
      %v210 = vpop.xlane.xlu0 %209
      %v211 = vsel %vm173, %v207, 0.0
      %212 = vadd.xlane.f32.xlu0 %v211
      %v213 = vpop.xlane.xlu0 %212
      %v214 = vsub.f32 %v210, %v193
      %v215 = vsub.f32 %v213, %v195
      %v216 = vmul.f32 %v214, 1.442695
      %v217 = vpow.pop %v216
      %v218 = vmul.f32 %v215, 1.442695
      %v219 = vpow.pop %v218
      %v220 = vsub.f32 0.0, %v214
      %v221 = vsub.f32 0.0, %v215
      %v222 = vsel %vm173, %v180, 0.0
      %223 = vadd.xlane.f32.xlu0 %v222
      %v224 = vpop.xlane.xlu0 %223
      %v225 = vsel %vm173, %v181, 0.0
      %226 = vadd.xlane.f32.xlu0 %v225
      %v227 = vpop.xlane.xlu0 %226
      %v228 = vmul.f32 %v193, 32.0
      %v229 = vmul.f32 %v195, 32.0
      %v230 = vsub.f32 %v228, %v224
      %v231 = vsub.f32 %v229, %v227
      %v232 = vmul.f32 %v220, 0.9
      %v233 = vmul.f32 %v221, 0.9
      %v234 = vmul.f32 %v230, 0.003125
      %v235 = vmul.f32 %v231, 0.003125
      %v236 = vadd.f32 %v232, %v234
      %v237 = vadd.f32 %v233, %v235
      %v238 = vsub.f32 1.0, %v217
      %v239 = vsub.f32 1.0, %v219
      %v240 = vadd.f32 %v236, %v238
      %v241 = vadd.f32 %v237, %v239
      %vm242 = vcmask 7168
      %243 = vst.msk [vmem:[%s167] sm:$0xff] %vm242, %v240
      %244 = vst.msk [vmem:[%s167 + $0x8] sm:$0xff] %vm242, %v241
      %s245 = smul.u32 2, %s13
      %p246 = scmp.lt.s32.totalorder %s245, 3
      %s247 = scalar_select %p246, %s245, 3
      %s248 = smul.addr %s247, 8
      %s249 = scalar_lea.vmem %s2, %s248
      // Predicated region
      $region29: #{tpu_custom_call.1} parent=27 // pred_check
        %p250 = pneg %p83
      $region30: #{tpu_custom_call.1} parent=27 // pred_check_branch
        %252 = sbr.rel (%p250) target = $region32
      $region31: #{tpu_custom_call.1} parent=27 // pred_region
        %s253 = smul.u32 2, %s13
      $region32: #{tpu_custom_call.1} parent=27 // pred_fallthru
        _
    $region28: #{tpu_custom_call.1} parent=5 // pred_fallthru
      _
    %p254 = scmp.le.s32.totalorder 2, %s8
    // Predicated region
    $region33: #{tpu_custom_call.1} parent=5 // pred_check
      %p255 = pneg %p254
    $region34: #{tpu_custom_call.1} parent=5 // pred_check_branch
      %257 = sbr.rel (%p255) target = $region36
    $region35: #{tpu_custom_call.1} parent=5 // pred_region
      %s258 = ssub.s32 %s8, 2
      // Predicated region
      $region37: #{tpu_custom_call.1} parent=35 // pred_check
        %p259 = pneg %p89
      $region38: #{tpu_custom_call.1} parent=35 // pred_check_branch
        %261 = sbr.rel (%p259) target = $region40
      $region39: #{tpu_custom_call.1} parent=35 // pred_region
        %s262 = smul.u32 2, %s14
        %p263 = scmp.lt.s32.totalorder %s262, 3
        %s264 = scalar_select %p263, %s262, 3
        %s265 = smul.addr %s264, 8
        %s266 = scalar_lea.vmem %s2, %s265
      $region40: #{tpu_custom_call.1} parent=35 // pred_fallthru
        _
    $region36: #{tpu_custom_call.1} parent=5 // pred_fallthru
      _
  $region6: #{tpu_custom_call.1} parent=0 // loop_footer
    %s12 = sadd.s32 1, %s8
  $region7: #{tpu_custom_call.1} parent=0 // loop_footer_branch
    %7 = sbr.rel target = $region3
  $region8: #{tpu_custom_call.1} parent=0 // loop_exit
    _

</llo_original>
